<compile_context>
chip_gen: v5e
topology: v5e:2x2
jax: 0.10.0
libtpu: 0.0.40
codegen_flags: <defaults>
</compile_context>

<pallas_src>
import numpy as np
import jax
import jax.numpy as jnp
from jax.experimental import pallas as pl
from jax.experimental.pallas import tpu as pltpu

LANE = 128          # TPU lane width
HALO = LANE         # halo width (covers K - 1 for any K <= 129)


def _cdiv(a, b):
    return -(-a // b)


def _round_up(a, b):
    return _cdiv(a, b) * b


def conv1d_derivative(x, der_filter, resol, *, tl_target=2048,
                      block_budget_bytes=2 << 20):
    """x: (N, 1, L) f32, der_filter: (1, 1, K) host-constant weights, resol: float."""
    N, C, L = x.shape
    assert C == 1, "Conv1dDerivative uses a single input channel"

    w = np.asarray(der_filter, dtype=np.float32).reshape(-1)
    K = int(w.shape[0])
    assert K >= 1 and K - 1 <= HALO, "kernel_size too large for 128-lane halo"
    assert L >= K, "input shorter than kernel (valid conv undefined)"
    L_out = L - K + 1

    # Fixed (non-trainable) filter -> bake taps (1/resol folded in) as Python
    # float immediates; skip zero taps entirely.
    taps = [(k, float(t)) for k, t in enumerate(w / np.float32(resol))
            if float(t) != 0.0]

    # ---- L tiling: lane-aligned near-divisor of L_out, ~tl_target wide ------
    nt = max(1, _cdiv(L_out, tl_target))
    TL = _round_up(_cdiv(L_out, nt), LANE)
    nt = _cdiv(L_out, TL)

    # ---- N tiling: ~block_budget_bytes per (TN, TL) f32 block ---------------
    tn_cap = max(8, (block_budget_bytes // (4 * TL)) // 8 * 8)
    TN = min(_round_up(N, 8), tn_cap)
    gn = _cdiv(N, TN)

    # v7x has 2 TensorCores: ensure a 'parallel' axis has >= 2 steps when the
    # problem is large enough to split (no-op on v5e/v6e).
    if gn * nt == 1 and L_out > 2 * LANE:
        TL = _round_up(_cdiv(L_out, 2), LANE)
        nt = _cdiv(L_out, TL)

    x2 = x.reshape(N, L).astype(jnp.float32)   # free reshape, no padded copy

    # Compact halo array: for tile l it holds lanes [(l+1)*TL, (l+1)*TL+HALO)
    # of each signal, zero-filled past L.  Tiny gather (~HALO/TL of the input)
    # instead of materializing a fully padded copy of x.
    starts = (np.arange(nt, dtype=np.int64) + 1) * TL
    hidx = (starts[:, None] + np.arange(HALO, dtype=np.int64)[None, :]).reshape(-1)
    halo = jnp.take(x2, jnp.asarray(hidx, dtype=jnp.int32), axis=1,
                    mode="fill", fill_value=0.0)            # (N, nt*HALO)

    TLm = TL - HALO   # output lanes computable from the main tile alone

    def kernel(m_ref, h_ref, o_ref):
        m = m_ref[...]                                       # (TN, TL)
        # Last HALO output lanes need up to K-1 lanes from the next tile:
        # recompute them from a small (TN, 2*HALO) window (no full-width concat).
        xt = jnp.concatenate([m[:, TLm:], h_ref[...]], axis=-1)   # (TN, 2*HALO)
        patch = None
        for k, t in taps:
            seg = xt[:, k:k + HALO]                          # k + HALO <= 2*HALO
            patch = t * seg if patch is None else patch + t * seg
        if patch is None:                                    # all-zero filter
            patch = jnp.zeros((m.shape[0], HALO), jnp.float32)

        if TLm > 0:
            acc = None
            for k, t in taps:
                seg = m[:, k:k + TLm]                        # k + TLm <= TL
                acc = t * seg if acc is None else acc + t * seg
            if acc is None:
                acc = jnp.zeros((m.shape[0], TLm), jnp.float32)
            o_ref[:, :TLm] = acc
            o_ref[:, TLm:TL] = patch
        else:                                                # TL == HALO (tiny L)
            o_ref[...] = patch

    n_taps = max(1, len(taps))
    cost = pl.CostEstimate(
        flops=2 * n_taps * N * L_out,
        transcendentals=0,
        bytes_accessed=4 * (N * L + N * nt * HALO + N * L_out),
    )

    out = pl.pallas_call(
        kernel,
        out_shape=jax.ShapeDtypeStruct((N, L_out), jnp.float32),
        grid=(gn, nt),
        in_specs=[
            pl.BlockSpec((TN, TL), lambda n, l: (n, l)),     # main tile of x
            pl.BlockSpec((TN, HALO), lambda n, l: (n, l)),   # per-tile halo
        ],
        out_specs=pl.BlockSpec((TN, TL), lambda n, l: (n, l)),
        compiler_params=pltpu.CompilerParams(
            dimension_semantics=("parallel", "parallel"),
            vmem_limit_bytes=32 * 1024 * 1024,
        ),
        cost_estimate=cost,
    )(x2, halo)

    return out.reshape(N, 1, L_out)


def _reference(x, der_filter, resol):
    w = np.asarray(der_filter, dtype=np.float32).reshape(-1)
    K = w.shape[0]
    L_out = x.shape[-1] - K + 1
    acc = sum(float(w[k]) * x[:, :, k:k + L_out] for k in range(K))
    return acc / resol


if __name__ == "__main__":
    key = jax.random.PRNGKey(0)

    # Deterministic module parameters: central-difference filter, resol = 2*dt.
    dt = 0.05
    der_filter = jnp.array([[[-1.0, 0.0, 1.0]]], dtype=jnp.float32)  # (1, 1, 3)
    resol = 2.0 * dt

    # --- small shape consistent with the forward pass: (batch=2, ch=1, L=16)
    x_small = jax.random.normal(key, (2, 1, 16), dtype=jnp.float32)
    y_small = jax.block_until_ready(conv1d_derivative(x_small, der_filter, resol))
    ref_small = _reference(x_small, der_filter, resol)
    assert y_small.shape == (2, 1, 14)
    assert jnp.allclose(y_small, ref_small, atol=1e-4, rtol=1e-4)

    # --- moderate shape to exercise the multi-tile (halo + masked edge) path
    x_big = jax.random.normal(jax.random.PRNGKey(1), (4, 1, 2500), dtype=jnp.float32)
    y_big = jax.block_until_ready(conv1d_derivative(x_big, der_filter, resol))
    ref_big = _reference(x_big, der_filter, resol)
    assert y_big.shape == (4, 1, 2498)
    assert jnp.allclose(y_big, ref_big, atol=1e-4, rtol=1e-4)

    print("KERNEL_OK")
</pallas_src>

<mosaic_0001>
module attributes {stable_mosaic.version = 11 : i64} {
  func.func @kernel(%arg0: i32, %arg1: i32, %arg2: memref<8x128xf32, #tpu.memory_space<vmem>>, %arg3: memref<8x128xf32, #tpu.memory_space<vmem>>, %arg4: memref<8x128xf32, #tpu.memory_space<vmem>>) attributes {dimension_semantics = [#tpu.dimension_semantics<parallel>, #tpu.dimension_semantics<parallel>], iteration_bounds = array<i64: 1, 1>, scalar_prefetch = 0 : i64, scratch_operands = 0 : i64, tpu.core_type = #tpu.core_type<tc>, window_params = [{transform_indices = @transform_0, window_bounds = array<i64: 8, 128>}, {transform_indices = @transform_1, window_bounds = array<i64: 8, 128>}, {transform_indices = @transform_2, window_bounds = array<i64: 8, 128>}]} {
    %c0 = arith.constant 0 : index
    %c0_0 = arith.constant 0 : index
    %0 = vector.load %arg2[%c0, %c0_0] : memref<8x128xf32, #tpu.memory_space<vmem>>, vector<8x128xf32>
    %c0_1 = arith.constant 0 : index
    %c0_2 = arith.constant 0 : index
    %1 = vector.load %arg3[%c0_1, %c0_2] : memref<8x128xf32, #tpu.memory_space<vmem>>, vector<8x128xf32>
    %2 = tpu.concatenate %0, %1 in 1 : vector<8x128xf32>, vector<8x128xf32> -> vector<8x256xf32>
    %3 = vector.extract_strided_slice %2 {offsets = [0, 0], sizes = [8, 128], strides = [1, 1]} : vector<8x256xf32> to vector<8x128xf32>
    %cst = arith.constant -1.000000e+01 : f32
    %4 = vector.broadcast %cst : f32 to vector<8x128xf32>
    %5 = arith.mulf %4, %3 : vector<8x128xf32>
    %6 = vector.extract_strided_slice %2 {offsets = [0, 2], sizes = [8, 128], strides = [1, 1]} : vector<8x256xf32> to vector<8x128xf32>
    %cst_3 = arith.constant 1.000000e+01 : f32
    %7 = vector.broadcast %cst_3 : f32 to vector<8x128xf32>
    %8 = arith.mulf %7, %6 : vector<8x128xf32>
    %9 = arith.addf %5, %8 : vector<8x128xf32>
    %c0_4 = arith.constant 0 : index
    %c0_5 = arith.constant 0 : index
    %10 = vector.load %arg4[%c0_4, %c0_5] : memref<8x128xf32, #tpu.memory_space<vmem>>, vector<8x128xf32>
    tpu.vector_store %arg4[%c0_4, %c0_5], %9 {strides = array<i32>} : memref<8x128xf32, #tpu.memory_space<vmem>>, vector<8x128xf32>,
    return
  }
  func.func @transform_0(%arg0: i32, %arg1: i32) -> (i32, i32) {
    %c0_i32 = arith.constant 0 : i32
    return %arg0, %arg1 : i32, i32
  }
  func.func @transform_1(%arg0: i32, %arg1: i32) -> (i32, i32) {
    %c0_i32 = arith.constant 0 : i32
    return %arg0, %arg1 : i32, i32
  }
  func.func @transform_2(%arg0: i32, %arg1: i32) -> (i32, i32) {
    %c0_i32 = arith.constant 0 : i32
    return %arg0, %arg1 : i32, i32
  }
}

</mosaic_0001>

<llo_original>
// kernel: tpu_custom_call.1
$region0: #{tpu_custom_call.1}
  #allocation0 [shape = 'u32[]', space=smem, size = 0x4, offset = 0x4, fixed_abs, tag = 'smem constant byte address 0x4 - core index']
  #allocation1 [shape = 'u32[72,128]{1,0:T(1,128)}', space=vmem, size = 0x9000, scoped, tag = 'internal scratch']
  %s0 = inlined_call_operand.hbm [shape: f32[2,16], index: 0, kind: input, shape index: {}]
  %s1 = inlined_call_operand.hbm [shape: f32[2,128], index: 1, kind: input, shape index: {}]
  %s2 = inlined_call_operand.hbm [shape: f32[2,14], index: 2, kind: output, shape index: {}]
  %s3 = sld [smem:[#allocation0]]
  $region26: #{tpu_custom_call.1} parent=0
    _
  %s5 = ssub.s32 1, %s3
  %s6 = scalar_select 0, %s5, %s3
  $region1: #{tpu_custom_call.1} parent=0
    #allocation2 [shape = 'u8[4096]{0}', space=vmem, size = 0x1000, scoped, tag = 'input window, operand 0, single buffered']
    #allocation3 [shape = 's32[1]{0}', space=sflag, size = 0x4, scoped, tag = 'scoped memory for tpu_custom_call.1']
    #allocation4 [shape = 's32[1]{0}', space=sflag, size = 0x4, scoped, tag = 'scoped memory for tpu_custom_call.1']
    #allocation5 [shape = 'u8[4096]{0}', space=vmem, size = 0x1000, scoped, tag = 'input window, operand 1, single buffered']
    #allocation6 [shape = 's32[1]{0}', space=sflag, size = 0x4, scoped, tag = 'scoped memory for tpu_custom_call.1']
    #allocation7 [shape = 'u8[4096]{0}', space=vmem, size = 0x1000, scoped, tag = 'output window, operand 0, single buffered']
    %7 = vsyncpa [#allocation3], 0
    %8 = vsyncpa [#allocation6], 0
    %9 = vsyncpa [#allocation4], 0
    // Predicated region
    $region2: #{tpu_custom_call.1} parent=1 // pred_check
      _
    $region3: #{tpu_custom_call.1} parent=1 // pred_check_branch
      %11 = sbr.rel (0) target = $region5
    $region4: #{tpu_custom_call.1} parent=1 // pred_region
      %13 = vsyncadd [#allocation3], 96
      %s14 = sshll.u32 %s0, 4
      %s15 = int_to_ptr.hbm [resolvable:$true] %s14
      %s16 = sshll.u32 [#allocation2], 4
      %s17 = int_to_ptr.vmem [resolvable:$true] %s16
      %22 = dma.hbm_to_vmem [thread:$0]  %s15, 32, %s17, [#allocation3], 32, 32, 2
    $region5: #{tpu_custom_call.1} parent=1 // pred_fallthru
      _
    // Predicated region
    $region6: #{tpu_custom_call.1} parent=1 // pred_check
      _
    $region7: #{tpu_custom_call.1} parent=1 // pred_check_branch
      %24 = sbr.rel (0) target = $region9
    $region8: #{tpu_custom_call.1} parent=1 // pred_region
      %26 = vsyncadd [#allocation6], 96
      %s27 = sshll.u32 %s1, 4
      %s28 = int_to_ptr.hbm [resolvable:$true] %s27
      %s29 = sshll.u32 [#allocation5], 4
      %s30 = int_to_ptr.vmem [resolvable:$true] %s29
      %35 = dma.hbm_to_vmem [thread:$0]  %s28, 32, %s30, [#allocation6], 32, 32, 2
    $region9: #{tpu_custom_call.1} parent=1 // pred_fallthru
      _
    // Predicated region
    $region10: #{tpu_custom_call.1} parent=1 // pred_check
      _
    $region11: #{tpu_custom_call.1} parent=1 // pred_check_branch
      %37 = sbr.rel (0) target = $region13
    $region12: #{tpu_custom_call.1} parent=1 // pred_region
      %39 = dma.done [#allocation3], 128
    $region13: #{tpu_custom_call.1} parent=1 // pred_fallthru
      _
    // Predicated region
    $region14: #{tpu_custom_call.1} parent=1 // pred_check
      _
    $region15: #{tpu_custom_call.1} parent=1 // pred_check_branch
      %41 = sbr.rel (0) target = $region17
    $region16: #{tpu_custom_call.1} parent=1 // pred_region
      %43 = dma.done [#allocation6], 128
    $region17: #{tpu_custom_call.1} parent=1 // pred_fallthru
      _
    %v44 = vld [vmem:[#allocation2] sm:$0xff]
    %v45 = vld [vmem:[#allocation5] sm:$0xff]
    %v46 = vmul.f32 %v44, -10.0
    %v47 = vmul.f32 %v44, 10.0
    %v48 = vmul.f32 %v45, 10.0
    %51 = vrot.lane.b32.xlu0 %v47, 126
    %v52 = vpop.permute.xlu0 %51
    %53 = vrot.lane.b32.xlu0 %v48, 126
    %v54 = vpop.permute.xlu0 %53
    %vm55 = vcmask 1031168
    %v56 = vsel %vm55, %v52, %v54
    %v58 = vadd.f32 %v46, %v56
    %59 = vst [vmem:[#allocation7] sm:$0xff] %v58
    // Predicated region
    $region18: #{tpu_custom_call.1} parent=1 // pred_check
      _
    $region19: #{tpu_custom_call.1} parent=1 // pred_check_branch
      %61 = sbr.rel (0) target = $region21
    $region20: #{tpu_custom_call.1} parent=1 // pred_region
      %63 = vsyncadd [#allocation4], 96
      %s64 = sshll.u32 [#allocation7], 4
      %s65 = int_to_ptr.vmem [resolvable:$true] %s64
      %s66 = sshll.u32 %s2, 4
      %s67 = int_to_ptr.hbm [resolvable:$true] %s66
      %72 = dma.vmem_to_hbm [thread:$0]  %s65, 32, %s67, [#allocation4], 32, 32, 2
    $region21: #{tpu_custom_call.1} parent=1 // pred_fallthru
      _
    // Predicated region
    $region22: #{tpu_custom_call.1} parent=1 // pred_check
      _
    $region23: #{tpu_custom_call.1} parent=1 // pred_check_branch
      %74 = sbr.rel (0) target = $region25
    $region24: #{tpu_custom_call.1} parent=1 // pred_region
      %76 = dma.done [#allocation4], 128
    $region25: #{tpu_custom_call.1} parent=1 // pred_fallthru
      _
    %77 = vsyncpa [#allocation3], 1
    %78 = vsyncpa [#allocation6], 1
    %79 = vsyncpa [#allocation4], 1

</llo_original>
